<compile_context>
chip_gen: v5e
topology: v5e:2x2
jax: 0.10.0
libtpu: 0.0.40
codegen_flags: <defaults>
</compile_context>

<pallas_src>
import functools

import jax
import jax.numpy as jnp
from jax.experimental import pallas as pl
from jax.experimental.pallas import tpu as pltpu


def _round_up(x, m):
    return ((x + m - 1) // m) * m


def _choose_tile(dim, cap, align):
    """Largest useful tile: multiple of `align`, <= cap, minimizing padding of `dim`."""
    dim_a = _round_up(dim, align)
    if dim_a <= cap:
        return dim_a                      # single block, minimal padding
    best_t, best_key = align, None
    t = align
    while t <= cap:
        pad = _round_up(dim, t) - dim
        key = (pad, -t)                   # minimize padding, then prefer bigger tile
        if best_key is None or key < best_key:
            best_key, best_t = key, t
        t += align
    return best_t


def _divisor_tile(total, align):
    """Largest t (multiple of `align`) dividing `total` with total // t >= 2, else None."""
    if total < 2 * align:
        return None
    t = (total // 2) // align * align
    while t >= align:
        if total % t == 0:
            return t
        t -= align
    return None


# ----------------------------- Pallas kernel -------------------------------

def _dense_kernel(x_ref, w_ref, sb_ref, o_ref, *, neg_slope, nk):
    # Partial product for this k step: bf16 x bf16 -> f32 accumulation on the MXU.
    p = jnp.dot(x_ref[...], w_ref[...], preferred_element_type=jnp.float32)

    def _epilogue(acc):
        z = jnp.where(acc >= 0.0, acc, neg_slope * acc)          # LeakyReLU
        # Dropout(0.5): identity in eval mode.
        sb = sb_ref[...]                                          # (2, tn)
        return z * sb[0:1, :] + sb[1:2, :]                        # BatchNorm1d affine

    if nk == 1:
        # Single k step: fuse matmul + epilogue, no accumulator traffic at all.
        o_ref[...] = _epilogue(p)
    else:
        k = pl.program_id(2)

        @pl.when(k == 0)
        def _():
            o_ref[...] = p                # overwrite: no zero-init pass

        @pl.when(jnp.logical_and(k > 0, k < nk - 1))
        def _():
            o_ref[...] += p               # accumulate directly in the f32 output tile

        @pl.when(k == nk - 1)
        def _():
            # Fuse the final partial product into the epilogue (saves one RMW pass).
            o_ref[...] = _epilogue(o_ref[...] + p)


# ----------------------------- one-time parameter prep ----------------------

def prepare_dense_params(w, bn_scale, bn_bias, *, tn_cap=1024, tk_cap=2048):
    """Hoisted weight/BN prep: bf16 cast + padding paid once, not per forward call.

    w: (in_size, out_size) f32, bn_scale/bn_bias: (out_size,) f32 (eval-mode folded BN).
    """
    K, N = w.shape
    tn = _choose_tile(N, tn_cap, 128)     # lane-dense output, multiple of 128
    tk = _choose_tile(K, tk_cap, 128)     # fat k steps, multiple of 128
    Np, Kp = _round_up(N, tn), _round_up(K, tk)

    wb = w.astype(jnp.bfloat16)
    if (Kp, Np) != (K, N):
        wb = jnp.pad(wb, ((0, Kp - K), (0, Np - N)))

    # Merge scale (row 0) and bias (row 1) into one small array -> one per-j DMA.
    sb = jnp.zeros((2, Np), jnp.float32)
    sb = sb.at[0, :N].set(bn_scale.astype(jnp.float32))
    sb = sb.at[1, :N].set(bn_bias.astype(jnp.float32))

    return dict(w=wb, sb=sb, K=K, N=N, Kp=Kp, Np=Np, tk=tk, tn=tn)


# ----------------------------- forward --------------------------------------

def dense_forward(x, params, *, neg_slope=0.01, tm_cap=512):
    """Fused y = BN(Dropout(LeakyReLU(x.view(-1, in) @ w))) with eval-mode BN/Dropout.

    x: (..., in_size) f32. Returns (M, out_size) f32 where M = x.size // in_size.
    """
    K, N = params["K"], params["N"]
    Kp, Np = params["Kp"], params["Np"]
    tk, tn = params["tk"], params["tn"]
    wp, sb = params["w"], params["sb"]

    x2 = x.reshape(-1, K)
    M = x2.shape[0]

    # bf16 packs 16 sublanes per vreg -> tm multiple of 16; minimize Mp - M padding.
    tm = _choose_tile(M, tm_cap, 16)
    Mp = _round_up(M, tm)

    # v7x has 2 TensorCores: ensure >=2 blocks on a "parallel" axis when shapes allow.
    if Mp // tm == 1 and Np // tn == 1:
        tn2 = _divisor_tile(Np, 128)
        if tn2 is not None:
            tn = tn2
        elif M >= 32:
            tm = _choose_tile(M, max(16, (_round_up(M, 16) // 2) // 16 * 16), 16)
            Mp = _round_up(M, tm)

    # Activation prep: bf16 cast (halves HBM read), pad only when actually needed.
    xb = x2.astype(jnp.bfloat16)
    if (Mp, Kp) != (M, K):
        xb = jnp.pad(xb, ((0, Mp - M), (0, Kp - K)))

    grid = (Mp // tm, Np // tn, Kp // tk)

    out = pl.pallas_call(
        functools.partial(_dense_kernel, neg_slope=neg_slope, nk=grid[2]),
        out_shape=jax.ShapeDtypeStruct((Mp, Np), jnp.float32),
        grid_spec=pltpu.PrefetchScalarGridSpec(
            num_scalar_prefetch=0,
            grid=grid,
            in_specs=[
                pl.BlockSpec((tm, tk), lambda i, j, k: (i, k)),   # activations (bf16)
                pl.BlockSpec((tk, tn), lambda i, j, k: (k, j)),   # weights (bf16)
                pl.BlockSpec((2, tn), lambda i, j, k: (0, j)),    # BN scale/bias (f32)
            ],
            out_specs=pl.BlockSpec((tm, tn), lambda i, j, k: (i, j)),
        ),
        compiler_params=pltpu.CompilerParams(
            dimension_semantics=("parallel", "parallel", "arbitrary"),
            vmem_limit_bytes=48 * 1024 * 1024,   # big tiles, still safe on v7x (64 MiB)
        ),
    )(xb, wp, sb)

    return out[:M, :N]


# TODO(synk): train-mode semantics (stochastic Dropout(0.5) and BatchNorm1d batch
# statistics) are not reproduced; eval-mode (running-stat, no-dropout) semantics are used.


# ----------------------------- parameters & test ----------------------------

def make_params(key, in_size, out_size):
    kw, kg, kb, km, kv = jax.random.split(key, 5)
    # PyTorch nn.Linear weight layout is (out, in); transpose for x @ W^T.
    w_oi = jax.random.normal(kw, (out_size, in_size), jnp.float32) * (1.0 / in_size) ** 0.5
    gamma = 1.0 + 0.1 * jax.random.normal(kg, (out_size,), jnp.float32)
    beta = 0.1 * jax.random.normal(kb, (out_size,), jnp.float32)
    running_mean = 0.1 * jax.random.normal(km, (out_size,), jnp.float32)
    running_var = 0.5 + jnp.abs(jax.random.normal(kv, (out_size,), jnp.float32))
    eps = 1e-5
    scale = gamma / jnp.sqrt(running_var + eps)   # eval-mode BN folded affine
    bias = beta - running_mean * scale
    return w_oi.T, scale, bias                    # (in, out), (out,), (out,)


def reference_forward(x, w, scale, bias, neg_slope=0.01):
    z = x.reshape(-1, w.shape[0]) @ w
    z = jnp.where(z >= 0.0, z, neg_slope * z)
    return z * scale + bias


if __name__ == "__main__":
    key = jax.random.PRNGKey(0)
    pkey, xkey = jax.random.split(key)

    in_size, out_size = 32, 64
    w, bn_scale, bn_bias = make_params(pkey, in_size, out_size)
    # forward does x.view(-1, in_size): a (2, 8, 32) input becomes a (16, 32) batch.
    x = jax.random.normal(xkey, (2, 8, in_size), jnp.float32)

    # One-time weight/BN prep (hoisted out of the per-call path).
    params = prepare_dense_params(w, bn_scale, bn_bias)

    fwd = jax.jit(lambda inp: dense_forward(inp, params))
    out = jax.block_until_ready(fwd(x))

    assert out.shape == (16, out_size), out.shape
    assert out.dtype == jnp.float32

    ref = reference_forward(x, w, bn_scale, bn_bias)
    assert jnp.allclose(out, ref, rtol=2e-2, atol=2e-2), float(jnp.max(jnp.abs(out - ref)))

    print("KERNEL_OK")
</pallas_src>

<mosaic_0001>
module attributes {stable_mosaic.version = 11 : i64} {
  func.func @_dense_kernel(%arg0: i32, %arg1: i32, %arg2: i32, %arg3: memref<16x128xbf16, #tpu.memory_space<vmem>>, %arg4: memref<128x128xbf16, #tpu.memory_space<vmem>>, %arg5: memref<2x128xf32, #tpu.memory_space<vmem>>, %arg6: memref<16x128xf32, #tpu.memory_space<vmem>>) attributes {dimension_semantics = [#tpu.dimension_semantics<parallel>, #tpu.dimension_semantics<parallel>, #tpu.dimension_semantics<arbitrary>], iteration_bounds = array<i64: 1, 1, 1>, scalar_prefetch = 0 : i64, scratch_operands = 0 : i64, tpu.core_type = #tpu.core_type<tc>, window_params = [{transform_indices = @transform_0, window_bounds = array<i64: 16, 128>}, {transform_indices = @transform_1, window_bounds = array<i64: 128, 128>}, {transform_indices = @transform_2, window_bounds = array<i64: 2, 128>}, {transform_indices = @transform_3, window_bounds = array<i64: 16, 128>}]} {
    %c0 = arith.constant 0 : index
    %c0_0 = arith.constant 0 : index
    %0 = vector.load %arg3[%c0, %c0_0] : memref<16x128xbf16, #tpu.memory_space<vmem>>, vector<16x128xbf16>
    %c0_1 = arith.constant 0 : index
    %c0_2 = arith.constant 0 : index
    %1 = vector.load %arg4[%c0_1, %c0_2] : memref<128x128xbf16, #tpu.memory_space<vmem>>, vector<128x128xbf16>
    %cst = arith.constant dense<0.000000e+00> : vector<16x128xf32>
    %2 = tpu.matmul %0, %1, %cst {dimension_numbers = #tpu.dot_dimension_numbers<[1], [0], [0], [1], [0, 0, 1, 1], [], []>} : vector<16x128xbf16>, vector<128x128xbf16>, vector<16x128xf32> -> vector<16x128xf32>
    %cst_3 = arith.constant 0.000000e+00 : f32
    %3 = vector.broadcast %cst_3 : f32 to vector<16x128xf32>
    %4 = arith.cmpf oge, %2, %3 : vector<16x128xf32>
    %cst_4 = arith.constant 0.00999999977 : f32
    %5 = vector.broadcast %cst_4 : f32 to vector<16x128xf32>
    %6 = arith.mulf %5, %2 : vector<16x128xf32>
    %7 = arith.select %4, %2, %6 : vector<16x128xi1>, vector<16x128xf32>
    %c0_5 = arith.constant 0 : index
    %c0_6 = arith.constant 0 : index
    %8 = vector.load %arg5[%c0_5, %c0_6] : memref<2x128xf32, #tpu.memory_space<vmem>>, vector<2x128xf32>
    %9 = vector.extract_strided_slice %8 {offsets = [0, 0], sizes = [1, 128], strides = [1, 1]} : vector<2x128xf32> to vector<1x128xf32>
    %10 = vector.broadcast %9 : vector<1x128xf32> to vector<16x128xf32>
    %11 = arith.mulf %7, %10 : vector<16x128xf32>
    %12 = vector.extract_strided_slice %8 {offsets = [1, 0], sizes = [1, 128], strides = [1, 1]} : vector<2x128xf32> to vector<1x128xf32>
    %13 = vector.broadcast %12 : vector<1x128xf32> to vector<16x128xf32>
    %14 = arith.addf %11, %13 : vector<16x128xf32>
    %c0_7 = arith.constant 0 : index
    %c0_8 = arith.constant 0 : index
    %15 = vector.load %arg6[%c0_7, %c0_8] : memref<16x128xf32, #tpu.memory_space<vmem>>, vector<16x128xf32>
    tpu.vector_store %arg6[%c0_7, %c0_8], %14 {strides = array<i32>} : memref<16x128xf32, #tpu.memory_space<vmem>>, vector<16x128xf32>,
    return
  }
  func.func @transform_0(%arg0: i32, %arg1: i32, %arg2: i32) -> (i32, i32) {
    %c0_i32 = arith.constant 0 : i32
    return %arg0, %arg2 : i32, i32
  }
  func.func @transform_1(%arg0: i32, %arg1: i32, %arg2: i32) -> (i32, i32) {
    %c0_i32 = arith.constant 0 : i32
    return %arg2, %arg1 : i32, i32
  }
  func.func @transform_2(%arg0: i32, %arg1: i32, %arg2: i32) -> (i32, i32) {
    %c0_i32 = arith.constant 0 : i32
    %c0_i32_0 = arith.constant 0 : i32
    return %c0_i32, %arg1 : i32, i32
  }
  func.func @transform_3(%arg0: i32, %arg1: i32, %arg2: i32) -> (i32, i32) {
    %c0_i32 = arith.constant 0 : i32
    return %arg0, %arg1 : i32, i32
  }
}

</mosaic_0001>

<llo_original>
// kernel: _lambda_.1
$region0: #{_lambda_.1}
  #allocation0 [shape = 'u32[]', space=smem, size = 0x4, offset = 0x4, fixed_abs, tag = 'smem constant byte address 0x4 - core index']
  #allocation1 [shape = 'u32[72,128]{1,0:T(1,128)}', space=vmem, size = 0x9000, scoped, tag = 'internal scratch']
  %s0 = inlined_call_operand.vmem [shape: bf16[16,128], index: 0, kind: input, shape index: {}]
  %s1 = inlined_call_operand.hbm [shape: bf16[128,128], index: 1, kind: input, shape index: {}]
  %s2 = inlined_call_operand.vmem [shape: f32[2,128], index: 2, kind: input, shape index: {}]
  %s3 = inlined_call_operand.hbm [shape: f32[16,128], index: 3, kind: output, shape index: {}]
  %s4 = sld [smem:[#allocation0]]
  $region26: #{_lambda_.1} parent=0
    _
  %s6 = ssub.s32 1, %s4
  %s7 = scalar_select 0, %s6, %s4
  $region1: #{_lambda_.1} parent=0
    #allocation2 [shape = 'u8[32768]{0}', space=vmem, size = 0x8000, scoped, tag = 'input window, operand 1, single buffered']
    #allocation3 [shape = 's32[1]{0}', space=sflag, size = 0x4, scoped, tag = 'scoped memory for _lambda_.1']
    #allocation4 [shape = 's32[1]{0}', space=sflag, size = 0x4, scoped, tag = 'scoped memory for _lambda_.1']
    #allocation5 [shape = 'u8[8192]{0}', space=vmem, size = 0x2000, scoped, tag = 'output window, operand 0, single buffered']
    %8 = vsyncpa [#allocation3], 0
    %9 = vsyncpa [#allocation4], 0
    // Predicated region
    $region2: #{_lambda_.1} parent=1 // pred_check
      _
    $region3: #{_lambda_.1} parent=1 // pred_check_branch
      %11 = sbr.rel (0) target = $region5
    $region4: #{_lambda_.1} parent=1 // pred_region
      _
    $region5: #{_lambda_.1} parent=1 // pred_fallthru
      _
    // Predicated region
    $region6: #{_lambda_.1} parent=1 // pred_check
      _
    $region7: #{_lambda_.1} parent=1 // pred_check_branch
      %13 = sbr.rel (0) target = $region9
    $region8: #{_lambda_.1} parent=1 // pred_region
      %15 = vsyncadd [#allocation3], 0
      %s16 = sshll.u32 %s1, 4
      %s17 = int_to_ptr.hbm [resolvable:$true] %s16
      %s18 = sshll.u32 [#allocation2], 4
      %s19 = int_to_ptr.vmem [resolvable:$true] %s18
      %24 = dma.hbm_to_vmem [thread:$0]  %s17, 1024, %s19, [#allocation3], 64, 64, 4
    $region9: #{_lambda_.1} parent=1 // pred_fallthru
      _
    // Predicated region
    $region10: #{_lambda_.1} parent=1 // pred_check
      _
    $region11: #{_lambda_.1} parent=1 // pred_check_branch
      %26 = sbr.rel (0) target = $region13
    $region12: #{_lambda_.1} parent=1 // pred_region
      _
    $region13: #{_lambda_.1} parent=1 // pred_fallthru
      _
    // Predicated region
    $region14: #{_lambda_.1} parent=1 // pred_check
      _
    $region15: #{_lambda_.1} parent=1 // pred_check_branch
      %28 = sbr.rel (0) target = $region17
    $region16: #{_lambda_.1} parent=1 // pred_region
      %30 = dma.done [#allocation3], 1024
    $region17: #{_lambda_.1} parent=1 // pred_fallthru
      _
    %v31 = vld [vmem:[%s0] sm:$0xf]
    %v32 = vld [vmem:[%s0 + $0x4] sm:$0xf]
    %v33 = vld [vmem:[#allocation2] sm:$0xf]
    %v34 = vld [vmem:[#allocation2 + $0x4] sm:$0xf]
    %v35 = vld [vmem:[#allocation2 + $0x8] sm:$0xf]
    %v36 = vld [vmem:[#allocation2 + $0xc] sm:$0xf]
    %v37 = vld [vmem:[#allocation2 + $0x10] sm:$0xf]
    %v38 = vld [vmem:[#allocation2 + $0x14] sm:$0xf]
    %v39 = vld [vmem:[#allocation2 + $0x18] sm:$0xf]
    %v40 = vld [vmem:[#allocation2 + $0x1c] sm:$0xf]
    %v41 = vld [vmem:[#allocation2 + $0x20] sm:$0xf]
    %v42 = vld [vmem:[#allocation2 + $0x24] sm:$0xf]
    %v43 = vld [vmem:[#allocation2 + $0x28] sm:$0xf]
    %v44 = vld [vmem:[#allocation2 + $0x2c] sm:$0xf]
    %v45 = vld [vmem:[#allocation2 + $0x30] sm:$0xf]
    %v46 = vld [vmem:[#allocation2 + $0x34] sm:$0xf]
    %v47 = vld [vmem:[#allocation2 + $0x38] sm:$0xf]
    %v48 = vld [vmem:[#allocation2 + $0x3c] sm:$0xf]
    %v51 = vunpack.c.l.b16 %v31
    %v52 = vunpack.c.l.b16 %v32
    %v53 = vpack.c.b16 %v52, %v51
    %v71 = vunpack.c.l.b16 %v33
    %v72 = vunpack.c.l.b16 %v34
    %v73 = vunpack.c.l.b16 %v35
    %v74 = vunpack.c.l.b16 %v36
    %v75 = vunpack.c.l.b16 %v37
    %v76 = vunpack.c.l.b16 %v38
    %v77 = vunpack.c.l.b16 %v39
    %v78 = vunpack.c.l.b16 %v40
    %v79 = vunpack.c.l.b16 %v41
    %v80 = vunpack.c.l.b16 %v42
    %v81 = vunpack.c.l.b16 %v43
    %v82 = vunpack.c.l.b16 %v44
    %v83 = vunpack.c.l.b16 %v45
    %v84 = vunpack.c.l.b16 %v46
    %v85 = vunpack.c.l.b16 %v47
    %v86 = vunpack.c.l.b16 %v48
    %v87 = vpack.c.b16 %v72, %v71
    %v88 = vpack.c.b16 %v74, %v73
    %v89 = vpack.c.b16 %v76, %v75
    %v90 = vpack.c.b16 %v78, %v77
    %v91 = vpack.c.b16 %v80, %v79
    %v92 = vpack.c.b16 %v82, %v81
    %v93 = vpack.c.b16 %v84, %v83
    %v94 = vpack.c.b16 %v86, %v85
    %103 = vmatpush.bf16.msra.mxu0 %v94
    %104 = vmatpush.bf16.msra.mxu0 %v93
    %105 = vmatpush.bf16.msra.mxu0 %v92
    %106 = vmatpush.bf16.msra.mxu0 %v91
    %107 = vmatpush.bf16.msra.mxu0 %v90
    %108 = vmatpush.bf16.msra.mxu0 %v89
    %109 = vmatpush.bf16.msra.mxu0 %v88
    %110 = vmatpush.bf16.msra.mxu0 %v87
    %111 = vmatmul.bf16.gmra.mxu0 %v53
    %v112 = vpop.f32.mrf.mxu0
    %v113 = vadd.f32 0.0, %v112
    %v114 = vpop.f32.mrf.mxu0
    %v115 = vadd.f32 0.0, %v114
    %116 = vdwg.mxu0
    %vm117 = vcmp.ge.f32.partialorder %v113, 0.0
    %vm118 = vcmp.ge.f32.partialorder %v115, 0.0
    %v119 = vmul.f32 %v113, 0.01
    %v120 = vmul.f32 %v115, 0.01
    %v121 = vsel %vm117, %v113, %v119
    %v122 = vsel %vm118, %v115, %v120
    %v123 = vld [vmem:[%s2] sm:$0x3]
    %v124 = vperm.slane %v123, 0
    %v125 = vmul.f32 %v121, %v124
    %v126 = vmul.f32 %v122, %v124
    %v127 = vperm.slane %v123, 1
    %v128 = vadd.f32 %v125, %v127
    %v129 = vadd.f32 %v126, %v127
    %130 = vst [vmem:[#allocation5] sm:$0xff] %v128
    %131 = vst [vmem:[#allocation5 + $0x8] sm:$0xff] %v129
    // Predicated region
    $region18: #{_lambda_.1} parent=1 // pred_check
      _
    $region19: #{_lambda_.1} parent=1 // pred_check_branch
      %133 = sbr.rel (0) target = $region21
    $region20: #{_lambda_.1} parent=1 // pred_region
      %135 = vsyncadd [#allocation4], 0
      %s136 = sshll.u32 [#allocation5], 4
      %s137 = int_to_ptr.vmem [resolvable:$true] %s136
      %s138 = sshll.u32 %s3, 4
      %s139 = int_to_ptr.hbm [resolvable:$true] %s138
      %144 = dma.vmem_to_hbm [thread:$0]  %s137, 256, %s139, [#allocation4], 128, 128, 8
    $region21: #{_lambda_.1} parent=1 // pred_fallthru
      _
    // Predicated region
    $region22: #{_lambda_.1} parent=1 // pred_check
      _
    $region23: #{_lambda_.1} parent=1 // pred_check_branch
      %146 = sbr.rel (0) target = $region25
    $region24: #{_lambda_.1} parent=1 // pred_region
      %148 = dma.done [#allocation4], 256
    $region25: #{_lambda_.1} parent=1 // pred_fallthru
      _
    %149 = vsyncpa [#allocation3], 1
    %150 = vsyncpa [#allocation4], 1

</llo_original>
